<compile_context>
chip_gen: v7x
topology: tpu7x:2x2x1
jax: 0.10.0
libtpu: 0.0.40
codegen_flags: <defaults>
</compile_context>

<pallas_src>
import functools

import jax
import jax.numpy as jnp
from jax.experimental import pallas as pl
from jax.experimental.pallas import tpu as pltpu

LANES = 128            # vreg lane width
SUBLANES = 8           # vreg sublane count
MAX_BLOCK_ROWS = 4096  # (4096, 128) f32 block = 2 MiB per input per grid step


def _huber_sum_kernel(x_ref, t_ref, out_ref, acc_ref, *,
                      delta, n_valid, block_rows, blocks_per_split):
    c = pl.program_id(0)   # parallel split (megacore / TC axis)
    i = pl.program_id(1)   # sequential reduction axis

    @pl.when(i == 0)
    def _():
        acc_ref[...] = jnp.zeros_like(acc_ref)

    x = x_ref[...].astype(jnp.float32)
    t = t_ref[...].astype(jnp.float32)
    diff = jnp.abs(x - t)
    loss = jnp.where(diff < delta, 0.5 * diff * diff,
                     delta * (diff - 0.5 * delta))

    # Mask everything past the true element count: the lane tail of the last
    # row, the unfilled part of a partial trailing block, and any clamped /
    # duplicated trailing block of the second split.  Uses the *unclamped*
    # logical block index so duplicated blocks mask to zero entirely.
    g = c * blocks_per_split + i                          # logical block index
    row_iota = jax.lax.broadcasted_iota(jnp.int32, (block_rows, LANES), 0)
    lane_iota = jax.lax.broadcasted_iota(jnp.int32, (block_rows, LANES), 1)
    elem_idx = (g * block_rows + row_iota) * LANES + lane_iota
    loss = jnp.where(elem_idx < n_valid, loss, 0.0)

    # Block-shaped accumulation: pure VPU adds, no per-step XLU reduce.
    acc_ref[...] = acc_ref[...] + loss

    @pl.when(i == pl.num_programs(1) - 1)
    def _():
        # One cross-lane/sublane reduce per split; store the scalar at [0, 0]
        # of an (8, 128)-aligned output tile (rest zeros) so the wrapper can
        # simply sum all partial outputs.
        partial = jnp.sum(acc_ref[...])
        r = jax.lax.broadcasted_iota(jnp.int32, (SUBLANES, LANES), 0)
        l = jax.lax.broadcasted_iota(jnp.int32, (SUBLANES, LANES), 1)
        out_ref[...] = jnp.where((r == 0) & (l == 0), partial, 0.0)


def huber_loss(inp, target, delta=1.0):
    """Mean Huber loss, matching torch.nn-style HuberLoss semantics."""
    assert inp.shape == target.shape, "input/target must have the same shape"
    n_elems = inp.size

    # Keep the HBM dtype (bf16 stays bf16 — cast to f32 happens in-kernel).
    x = jnp.ravel(inp)
    t = jnp.ravel(target)

    # Only pad up to one full lane row if needed (<=127 elems); zero padding
    # contributes Huber(0) == 0 and is additionally masked in-kernel.
    rem = n_elems % LANES
    if rem != 0:
        x = jnp.pad(x, (0, LANES - rem))
        t = jnp.pad(t, (0, LANES - rem))

    rows = x.shape[0] // LANES
    x2 = x.reshape(rows, LANES)
    t2 = t.reshape(rows, LANES)

    # Large blocks to amortize per-grid-step overhead; small inputs use the
    # whole array as a single block (block dim == full array dim is allowed).
    block_rows = MAX_BLOCK_ROWS if rows >= MAX_BLOCK_ROWS else rows
    n_blocks = (rows + block_rows - 1) // block_rows

    # Split the block range across TensorCores (helps v7x, which has 2 TCs);
    # on single-TC parts the extra axis just runs sequentially.
    num_splits = 2 if n_blocks >= 2 else 1
    blocks_per_split = (n_blocks + num_splits - 1) // num_splits

    def in_map(c, i):
        # Clamp a possibly out-of-range trailing block to the last real block;
        # its contribution is masked to zero inside the kernel.
        return (jnp.minimum(c * blocks_per_split + i, n_blocks - 1), 0)

    kernel = functools.partial(
        _huber_sum_kernel, delta=float(delta), n_valid=n_elems,
        block_rows=block_rows, blocks_per_split=blocks_per_split)

    itemsize = jnp.dtype(inp.dtype).itemsize
    partials = pl.pallas_call(
        kernel,
        out_shape=jax.ShapeDtypeStruct((num_splits * SUBLANES, LANES),
                                       jnp.float32),
        grid_spec=pltpu.PrefetchScalarGridSpec(
            num_scalar_prefetch=0,
            grid=(num_splits, blocks_per_split),
            in_specs=[
                pl.BlockSpec((block_rows, LANES), in_map),
                pl.BlockSpec((block_rows, LANES), in_map),
            ],
            out_specs=pl.BlockSpec((SUBLANES, LANES), lambda c, i: (c, 0)),
            scratch_shapes=[pltpu.VMEM((block_rows, LANES), jnp.float32)],
        ),
        compiler_params=pltpu.CompilerParams(
            dimension_semantics=("parallel", "arbitrary")),
        cost_estimate=pl.CostEstimate(
            flops=6 * n_elems,
            transcendentals=0,
            bytes_accessed=2 * n_elems * itemsize + 4 * num_splits * 1024),
    )(x2, t2)

    return jnp.sum(partials) / jnp.float32(n_elems)


if __name__ == "__main__":
    key = jax.random.PRNGKey(0)
    k1, k2, k3, k4 = jax.random.split(key, 4)

    # Primary check: NCHW-like shape from the module.
    x = jax.random.normal(k1, (2, 4, 16, 16), dtype=jnp.float32)
    y = jax.random.normal(k2, (2, 4, 16, 16), dtype=jnp.float32)
    out = jax.block_until_ready(huber_loss(x, y, delta=1.0))

    diff = jnp.abs(x - y)
    ref = jnp.where(diff < 1.0, 0.5 * diff * diff, 1.0 * (diff - 0.5)).mean()
    assert jnp.allclose(out, ref, rtol=1e-5, atol=1e-6), (out, ref)

    # Ragged size: exercises the lane-tail masking path.
    a = jax.random.normal(k3, (3, 5, 7), dtype=jnp.float32)
    b = jax.random.normal(k4, (3, 5, 7), dtype=jnp.float32)
    out2 = jax.block_until_ready(huber_loss(a, b, delta=1.0))
    d2 = jnp.abs(a - b)
    ref2 = jnp.where(d2 < 1.0, 0.5 * d2 * d2, 1.0 * (d2 - 0.5)).mean()
    assert jnp.allclose(out2, ref2, rtol=1e-5, atol=1e-6), (out2, ref2)

    print("KERNEL_OK")
</pallas_src>

<mosaic_0001>
module attributes {stable_mosaic.version = 11 : i64} {
  func.func @_huber_sum_kernel(%arg0: i32, %arg1: i32, %arg2: memref<16x128xf32, #tpu.memory_space<vmem>>, %arg3: memref<16x128xf32, #tpu.memory_space<vmem>>, %arg4: memref<8x128xf32, #tpu.memory_space<vmem>>, %arg5: memref<16x128xf32, #tpu.memory_space<vmem>>) attributes {dimension_semantics = [#tpu.dimension_semantics<parallel>, #tpu.dimension_semantics<arbitrary>], iteration_bounds = array<i64: 1, 1>, scalar_prefetch = 0 : i64, scratch_operands = 1 : i64, tpu.core_type = #tpu.core_type<tc>, window_params = [{transform_indices = @transform_0, window_bounds = array<i64: 16, 128>}, {transform_indices = @transform_1, window_bounds = array<i64: 16, 128>}, {transform_indices = @transform_2, window_bounds = array<i64: 8, 128>}]} {
    %c0_i32 = arith.constant 0 : i32
    %0 = arith.cmpi eq, %arg1, %c0_i32 : i32
    %1 = arith.extui %0 : i1 to i32
    %c0_i32_0 = arith.constant 0 : i32
    %2 = arith.cmpi ne, %1, %c0_i32_0 : i32
    scf.if %2 {
      %cst_14 = arith.constant 0.000000e+00 : f32
      %37 = vector.broadcast %cst_14 : f32 to vector<16x128xf32>
      %c0_15 = arith.constant 0 : index
      %c0_16 = arith.constant 0 : index
      %38 = vector.load %arg5[%c0_15, %c0_16] : memref<16x128xf32, #tpu.memory_space<vmem>>, vector<16x128xf32>
      tpu.vector_store %arg5[%c0_15, %c0_16], %37 {strides = array<i32>} : memref<16x128xf32, #tpu.memory_space<vmem>>, vector<16x128xf32>,
    } else {
    }
    %c0 = arith.constant 0 : index
    %c0_1 = arith.constant 0 : index
    %3 = vector.load %arg2[%c0, %c0_1] : memref<16x128xf32, #tpu.memory_space<vmem>>, vector<16x128xf32>
    %c0_2 = arith.constant 0 : index
    %c0_3 = arith.constant 0 : index
    %4 = vector.load %arg3[%c0_2, %c0_3] : memref<16x128xf32, #tpu.memory_space<vmem>>, vector<16x128xf32>
    %5 = arith.subf %3, %4 : vector<16x128xf32>
    %6 = math.absf %5 : vector<16x128xf32>
    %cst = arith.constant 1.000000e+00 : f32
    %7 = vector.broadcast %cst : f32 to vector<16x128xf32>
    %8 = arith.cmpf olt, %6, %7 : vector<16x128xf32>
    %cst_4 = arith.constant 5.000000e-01 : f32
    %9 = vector.broadcast %cst_4 : f32 to vector<16x128xf32>
    %10 = arith.mulf %9, %6 : vector<16x128xf32>
    %11 = arith.mulf %10, %6 : vector<16x128xf32>
    %cst_5 = arith.constant 5.000000e-01 : f32
    %12 = vector.broadcast %cst_5 : f32 to vector<16x128xf32>
    %13 = arith.subf %6, %12 : vector<16x128xf32>
    %cst_6 = arith.constant 1.000000e+00 : f32
    %14 = vector.broadcast %cst_6 : f32 to vector<16x128xf32>
    %15 = arith.mulf %14, %13 : vector<16x128xf32>
    %16 = arith.select %8, %11, %15 : vector<16x128xi1>, vector<16x128xf32>
    %c1_i32 = arith.constant 1 : i32
    %17 = arith.muli %arg0, %c1_i32 : i32
    %18 = arith.addi %17, %arg1 : i32
    %19 = tpu.iota {dimensions = array<i32: 0>} : vector<16x128xi32>
    %20 = tpu.iota {dimensions = array<i32: 1>} : vector<16x128xi32>
    %c16_i32 = arith.constant 16 : i32
    %21 = arith.muli %18, %c16_i32 : i32
    %22 = vector.broadcast %21 : i32 to vector<16x128xi32>
    %23 = arith.addi %22, %19 : vector<16x128xi32>
    %c128_i32 = arith.constant 128 : i32
    %24 = vector.broadcast %c128_i32 : i32 to vector<16x128xi32>
    %25 = arith.muli %23, %24 : vector<16x128xi32>
    %26 = arith.addi %25, %20 : vector<16x128xi32>
    %c2048_i32 = arith.constant 2048 : i32
    %27 = vector.broadcast %c2048_i32 : i32 to vector<16x128xi32>
    %28 = arith.cmpi slt, %26, %27 : vector<16x128xi32>
    %cst_7 = arith.constant 0.000000e+00 : f32
    %29 = vector.broadcast %cst_7 : f32 to vector<16x128xf32>
    %30 = arith.select %28, %16, %29 : vector<16x128xi1>, vector<16x128xf32>
    %c0_8 = arith.constant 0 : index
    %c0_9 = arith.constant 0 : index
    %31 = vector.load %arg5[%c0_8, %c0_9] : memref<16x128xf32, #tpu.memory_space<vmem>>, vector<16x128xf32>
    %32 = arith.addf %31, %30 : vector<16x128xf32>
    %c0_10 = arith.constant 0 : index
    %c0_11 = arith.constant 0 : index
    %33 = vector.load %arg5[%c0_10, %c0_11] : memref<16x128xf32, #tpu.memory_space<vmem>>, vector<16x128xf32>
    tpu.vector_store %arg5[%c0_10, %c0_11], %32 {strides = array<i32>} : memref<16x128xf32, #tpu.memory_space<vmem>>, vector<16x128xf32>,
    %c0_i32_12 = arith.constant 0 : i32
    %34 = arith.cmpi eq, %arg1, %c0_i32_12 : i32
    %35 = arith.extui %34 : i1 to i32
    %c0_i32_13 = arith.constant 0 : i32
    %36 = arith.cmpi ne, %35, %c0_i32_13 : i32
    scf.if %36 {
      %c0_14 = arith.constant 0 : index
      %c0_15 = arith.constant 0 : index
      %37 = vector.load %arg5[%c0_14, %c0_15] : memref<16x128xf32, #tpu.memory_space<vmem>>, vector<16x128xf32>
      %38 = vector.shape_cast %37 : vector<16x128xf32> to vector<1x16x128xf32>
      %cst_16 = arith.constant dense<0.000000e+00> : vector<1xf32>
      %39 = vector.multi_reduction <add>, %38, %cst_16 [1, 2] : vector<1x16x128xf32> to vector<1xf32>
      %40 = vector.shape_cast %39 : vector<1xf32> to vector<1x1x1xf32>
      %41 = vector.extract %40[0, 0, 0] : f32 from vector<1x1x1xf32>
      %42 = tpu.iota {dimensions = array<i32: 0>} : vector<8x128xi32>
      %43 = tpu.iota {dimensions = array<i32: 1>} : vector<8x128xi32>
      %c0_i32_17 = arith.constant 0 : i32
      %44 = vector.broadcast %c0_i32_17 : i32 to vector<8x128xi32>
      %45 = arith.cmpi eq, %42, %44 : vector<8x128xi32>
      %c0_i32_18 = arith.constant 0 : i32
      %46 = vector.broadcast %c0_i32_18 : i32 to vector<8x128xi32>
      %47 = arith.cmpi eq, %43, %46 : vector<8x128xi32>
      %48 = arith.andi %45, %47 : vector<8x128xi1>
      %cst_19 = arith.constant 0.000000e+00 : f32
      %49 = vector.broadcast %41 : f32 to vector<8x128xf32>
      %50 = vector.broadcast %cst_19 : f32 to vector<8x128xf32>
      %51 = arith.select %48, %49, %50 : vector<8x128xi1>, vector<8x128xf32>
      %c0_20 = arith.constant 0 : index
      %c0_21 = arith.constant 0 : index
      %52 = vector.load %arg4[%c0_20, %c0_21] : memref<8x128xf32, #tpu.memory_space<vmem>>, vector<8x128xf32>
      tpu.vector_store %arg4[%c0_20, %c0_21], %51 {strides = array<i32>} : memref<8x128xf32, #tpu.memory_space<vmem>>, vector<8x128xf32>,
    } else {
    }
    return
  }
  func.func @transform_0(%arg0: i32, %arg1: i32) -> (i32, i32) {
    %c1_i32 = arith.constant 1 : i32
    %0 = arith.muli %arg0, %c1_i32 : i32
    %1 = arith.addi %0, %arg1 : i32
    %c0_i32 = arith.constant 0 : i32
    %2 = arith.minsi %1, %c0_i32 : i32
    %c0_i32_0 = arith.constant 0 : i32
    %c0_i32_1 = arith.constant 0 : i32
    return %2, %c0_i32_0 : i32, i32
  }
  func.func @transform_1(%arg0: i32, %arg1: i32) -> (i32, i32) {
    %c1_i32 = arith.constant 1 : i32
    %0 = arith.muli %arg0, %c1_i32 : i32
    %1 = arith.addi %0, %arg1 : i32
    %c0_i32 = arith.constant 0 : i32
    %2 = arith.minsi %1, %c0_i32 : i32
    %c0_i32_0 = arith.constant 0 : i32
    %c0_i32_1 = arith.constant 0 : i32
    return %2, %c0_i32_0 : i32, i32
  }
  func.func @transform_2(%arg0: i32, %arg1: i32) -> (i32, i32) {
    %c0_i32 = arith.constant 0 : i32
    %c0_i32_0 = arith.constant 0 : i32
    return %arg0, %c0_i32 : i32, i32
  }
}

</mosaic_0001>

<llo_original>
// kernel: tpu_custom_call.1
$region0: #{tpu_custom_call.1}
  #allocation0 [shape = 'u32[]', space=smem, size = 0x4, offset = 0x4, fixed_abs, tag = 'smem constant byte address 0x4 - core index']
  #allocation1 [shape = 'u32[144,128]{1,0:T(1,128)}', space=vmem, size = 0x12000, scoped, tag = 'internal scratch']
  #allocation2 [shape = 'f32[16,128]{1,0:T(8,128)}', space=vmem, size = 0x2000, scoped, tag = 'scratch operand']
  %s0 = inlined_call_operand.hbm [shape: f32[16,128], index: 0, kind: input, shape index: {}]
  %s1 = inlined_call_operand.hbm [shape: f32[16,128], index: 1, kind: input, shape index: {}]
  %s2 = inlined_call_operand.hbm [shape: f32[8,128], index: 2, kind: output, shape index: {}]
  %s3 = sld [smem:[#allocation0]]
  $region34: #{tpu_custom_call.1} parent=0
    _
  %s5 = ssub.s32 1, %s3
  %s6 = scalar_select 0, %s5, %s3
  $region1: #{tpu_custom_call.1} parent=0
    #allocation3 [shape = 'u8[8192]{0}', space=vmem, size = 0x2000, scoped, tag = 'input window, operand 0, single buffered']
    #allocation4 [shape = 's32[1]{0}', space=sflag, size = 0x4, scoped, tag = 'scoped memory for tpu_custom_call.1']
    #allocation5 [shape = 's32[1]{0}', space=sflag, size = 0x4, scoped, tag = 'scoped memory for tpu_custom_call.1']
    #allocation6 [shape = 'u8[8192]{0}', space=vmem, size = 0x2000, scoped, tag = 'input window, operand 1, single buffered']
    #allocation7 [shape = 's32[1]{0}', space=sflag, size = 0x4, scoped, tag = 'scoped memory for tpu_custom_call.1']
    #allocation8 [shape = 'u8[4096]{0}', space=vmem, size = 0x1000, scoped, tag = 'output window, operand 0, single buffered']
    %7 = vsyncpa [#allocation4], 0
    %8 = vsyncpa [#allocation7], 0
    %9 = vsyncpa [#allocation5], 0
    // Predicated region
    $region2: #{tpu_custom_call.1} parent=1 // pred_check
      _
    $region3: #{tpu_custom_call.1} parent=1 // pred_check_branch
      %11 = sbr.rel (0) target = $region5
    $region4: #{tpu_custom_call.1} parent=1 // pred_region
      %s12 = sadd.s32 0, 0
      %p13 = scmp.lt.s32.totalorder %s12, 0
      %s14 = scalar_select %p13, %s12, 0
      %s15 = smul.u32 2, %s14
      %s17 = ssub.s32 256, 256
      %18 = vsyncadd [#allocation4], %s17
      %s19 = smul.addr %s15, 128
      %s20 = scalar_lea.hbm %s0, %s19
      %s21 = sshll.u32 [#allocation3], 4
      %s22 = int_to_ptr.vmem [resolvable:$true] %s21
      %27 = dma.hbm_to_vmem [thread:$0]  %s20, 256, %s22, [#allocation4], 128, 128, 8
    $region5: #{tpu_custom_call.1} parent=1 // pred_fallthru
      _
    // Predicated region
    $region6: #{tpu_custom_call.1} parent=1 // pred_check
      _
    $region7: #{tpu_custom_call.1} parent=1 // pred_check_branch
      %29 = sbr.rel (0) target = $region9
    $region8: #{tpu_custom_call.1} parent=1 // pred_region
      %s30 = sadd.s32 0, 0
      %p31 = scmp.lt.s32.totalorder %s30, 0
      %s32 = scalar_select %p31, %s30, 0
      %s33 = smul.u32 2, %s32
      %s35 = ssub.s32 256, 256
      %36 = vsyncadd [#allocation7], %s35
      %s37 = smul.addr %s33, 128
      %s38 = scalar_lea.hbm %s1, %s37
      %s39 = sshll.u32 [#allocation6], 4
      %s40 = int_to_ptr.vmem [resolvable:$true] %s39
      %45 = dma.hbm_to_vmem [thread:$0]  %s38, 256, %s40, [#allocation7], 128, 128, 8
    $region9: #{tpu_custom_call.1} parent=1 // pred_fallthru
      _
    // Predicated region
    $region10: #{tpu_custom_call.1} parent=1 // pred_check
      _
    $region11: #{tpu_custom_call.1} parent=1 // pred_check_branch
      %47 = sbr.rel (0) target = $region13
    $region12: #{tpu_custom_call.1} parent=1 // pred_region
      %48 = dma.done [#allocation4], 256
    $region13: #{tpu_custom_call.1} parent=1 // pred_fallthru
      _
    // Predicated region
    $region14: #{tpu_custom_call.1} parent=1 // pred_check
      _
    $region15: #{tpu_custom_call.1} parent=1 // pred_check_branch
      %50 = sbr.rel (0) target = $region17
    $region16: #{tpu_custom_call.1} parent=1 // pred_region
      %51 = dma.done [#allocation7], 256
    $region17: #{tpu_custom_call.1} parent=1 // pred_fallthru
      _
    %s52 = sadd.s32 0, 0
    %p53 = scmp.lt.s32.totalorder %s52, 0
    %s54 = scalar_select %p53, %s52, 0
    %s55 = smul.u32 2, %s54
    %s56 = sadd.s32 0, 0
    %p57 = scmp.lt.s32.totalorder %s56, 0
    %s58 = scalar_select %p57, %s56, 0
    %s59 = smul.u32 2, %s58
    %p60 = scmp.eq.s32.totalorder 0, 0
    // Predicated region
    $region18: #{tpu_custom_call.1} parent=1 // pred_check
      %p61 = pneg %p60
    $region19: #{tpu_custom_call.1} parent=1 // pred_check_branch
      %63 = sbr.rel (%p61) target = $region21
    $region20: #{tpu_custom_call.1} parent=1 // pred_region
      %64 = vst [vmem:[#allocation2] sm:$0xff] 0.0
      %65 = vst [vmem:[#allocation2 + $0x8] sm:$0xff] 0.0
    $region21: #{tpu_custom_call.1} parent=1 // pred_fallthru
      _
    %v66 = vld [vmem:[#allocation3] sm:$0xff]
    %v67 = vld [vmem:[#allocation3 + $0x8] sm:$0xff]
    %v68 = vld [vmem:[#allocation6] sm:$0xff]
    %v69 = vld [vmem:[#allocation6 + $0x8] sm:$0xff]
    %v70 = vsub.f32 %v66, %v68
    %v71 = vsub.f32 %v67, %v69
    %v72 = vand.u32 2147483647, %v70
    %v73 = vand.u32 2147483647, %v71
    %vm74 = vcmp.lt.f32.partialorder %v72, 1.0
    %vm75 = vcmp.lt.f32.partialorder %v73, 1.0
    %v76 = vmul.f32 %v72, 0.5
    %v77 = vmul.f32 %v73, 0.5
    %v78 = vmul.f32 %v76, %v72
    %v79 = vmul.f32 %v77, %v73
    %v80 = vsub.f32 %v72, 0.5
    %v81 = vsub.f32 %v73, 0.5
    %v82 = vsel %vm74, %v78, %v80
    %v83 = vsel %vm75, %v79, %v81
    %s84 = sadd.s32 0, 0
    %v85 = vlaneseq
    %v86 = vshrl.u32 %v85, 7
    %v87 = vadd.s32 %v86, 8
    %v88 = vlaneseq
    %v89 = vand.u32 %v88, 127
    %s90 = smul.u32 %s84, 16
    %v91 = vstv %s90
    %v92 = vadd.s32 %v91, %v86
    %v93 = vadd.s32 %v91, %v87
    %v94 = vmul.u32 %v92, 128
    %v95 = vmul.u32 %v93, 128
    %v96 = vadd.s32 %v94, %v89
    %v97 = vadd.s32 %v95, %v89
    %vm98 = vcmp.lt.s32.totalorder %v96, 2048
    %vm99 = vcmp.lt.s32.totalorder %v97, 2048
    %v100 = vsel %vm98, %v82, 0.0
    %v101 = vsel %vm99, %v83, 0.0
    %v102 = vld [vmem:[#allocation2] sm:$0xff]
    %v103 = vld [vmem:[#allocation2 + $0x8] sm:$0xff]
    %v104 = vadd.f32 %v102, %v100
    %v105 = vadd.f32 %v103, %v101
    %106 = vst [vmem:[#allocation2] sm:$0xff] %v104
    %107 = vst [vmem:[#allocation2 + $0x8] sm:$0xff] %v105
    // Predicated region
    $region22: #{tpu_custom_call.1} parent=1 // pred_check
      %p108 = pneg %p60
    $region23: #{tpu_custom_call.1} parent=1 // pred_check_branch
      %110 = sbr.rel (%p108) target = $region25
    $region24: #{tpu_custom_call.1} parent=1 // pred_region
      %v111 = vld [vmem:[#allocation2] sm:$0xff]
      %v112 = vld [vmem:[#allocation2 + $0x8] sm:$0xff]
      %v113 = vadd.f32 %v111, %v112
      %114 = vadd.xlane.f32.xlu0 %v113
      %v115 = vpop.xlane.xlu0 %114
      %v116 = vrot.slane %v115, 4
      %v117 = vadd.f32 %v115, %v116
      %v118 = vrot.slane %v117, 2
      %v119 = vadd.f32 %v117, %v118
      %v120 = vrot.slane %v119, 1
      %v121 = vadd.f32 %v119, %v120
      %s122 = vtos %v121
      %vm123 = vcmp.eq.s32.totalorder %v86, 0
      %vm124 = vcmp.eq.s32.totalorder %v89, 0
      %vm125 = vmand %vm123, %vm124
      %v126 = vstv %s122
      %v127 = vsel %vm125, %v126, 0.0
      %128 = vst [vmem:[#allocation8] sm:$0xff] %v127
    $region25: #{tpu_custom_call.1} parent=1 // pred_fallthru
      _
    // Predicated region
    $region26: #{tpu_custom_call.1} parent=1 // pred_check
      _
    $region27: #{tpu_custom_call.1} parent=1 // pred_check_branch
      %130 = sbr.rel (0) target = $region29
    $region28: #{tpu_custom_call.1} parent=1 // pred_region
      %s132 = ssub.s32 128, 128
      %133 = vsyncadd [#allocation5], %s132
      %s135 = sshll.u32 [#allocation8], 4
      %s136 = int_to_ptr.vmem [resolvable:$true] %s135
      %138 = dma.vmem_to_hbm [thread:$0]  %s136, 128, %s2, [#allocation5]
    $region29: #{tpu_custom_call.1} parent=1 // pred_fallthru
      _
    // Predicated region
    $region30: #{tpu_custom_call.1} parent=1 // pred_check
      _
    $region31: #{tpu_custom_call.1} parent=1 // pred_check_branch
      %140 = sbr.rel (0) target = $region33
    $region32: #{tpu_custom_call.1} parent=1 // pred_region
      %141 = dma.done [#allocation5], 128
    $region33: #{tpu_custom_call.1} parent=1 // pred_fallthru
      _
    %142 = vsyncpa [#allocation4], 1
    %143 = vsyncpa [#allocation7], 1
    %144 = vsyncpa [#allocation5], 1

</llo_original>
